<compile_context>
chip_gen: v5e
topology: v5e:2x2
jax: 0.10.0
libtpu: 0.0.40
codegen_flags: <defaults>
</compile_context>

<pallas_src>
import functools
import math

import jax
import jax.numpy as jnp
from jax.experimental import pallas as pl
from jax.experimental.pallas import tpu as pltpu

EMBED_DIM = 2048  # PANNs scene-embedding dimensionality (fixed by the backbone)
LANE = 128        # TPU lane width


def _round_up(x, m):
    return ((x + m - 1) // m) * m


def _lane_pad(dim):
    # v6e/v7x MXUs are 256 wide: pad genuinely-large dims to a multiple of 256;
    # small dims just go to one full 128-lane group (optimal on v5e, fine elsewhere).
    return _round_up(dim, 256) if dim > LANE else LANE


def _pick_batch_tile(B, *, max_tm=512, min_steps=2, step_overhead_rows=16):
    """Pick (tm, Bp): tm multiple of 8, <= max_tm, >= min_steps grid steps when
    B allows (megacore sharding on v7x), trading padded rows against per-step
    overhead (~0.35 us/step ~ a few rows of mem-bound work)."""
    B8 = _round_up(max(B, 1), 8)
    if B8 >= 8 * min_steps:
        cap = min(max_tm, _round_up((B8 + min_steps - 1) // min_steps, 8))
    else:
        cap = min(max_tm, B8)
    best_tm, best_bp, best_key = None, None, None
    for tm in (512, 384, 256, 192, 128, 64, 32, 16, 8):
        if tm > cap:
            continue
        bp = _round_up(B8, tm)
        steps = bp // tm
        key = (steps * step_overhead_rows + (bp - B), -tm)  # waste + overhead, prefer bigger tm
        if best_key is None or key < best_key:
            best_tm, best_bp, best_key = tm, bp, key
    return best_tm, best_bp


def _vmem_limit_bytes():
    """~48 MiB on v7x (64 MiB physical), 96 MiB on v5e/v6e (128 MiB physical)."""
    cap = None
    try:
        cap = getattr(pltpu.get_tpu_info(), "vmem_capacity_bytes", None)
    except Exception:
        cap = None
    if not cap:
        return 48 * 1024 * 1024
    return int(min(int(cap) - 16 * 1024 * 1024, 96 * 1024 * 1024))


def _proj_mlp_kernel(x_ref, w1_ref, b1_ref, w2_ref, b2_ref, w3_ref, b3_ref, o_ref):
    """Fused 3-layer MLP on one batch tile.

    x: [tm, 2048] bf16; Wk: bf16 pre-transposed [in, out] (lane-padded);
    bk: f32 [1, out_padded].  MXU matmuls accumulate in f32.
    """
    x = x_ref[...]

    h1 = jnp.dot(x, w1_ref[...], preferred_element_type=jnp.float32) + b1_ref[...]
    h1 = jnp.maximum(h1, 0.0).astype(w2_ref.dtype)

    h2 = jnp.dot(h1, w2_ref[...], preferred_element_type=jnp.float32) + b2_ref[...]
    h2 = jnp.maximum(h2, 0.0).astype(w3_ref.dtype)

    out = jnp.dot(h2, w3_ref[...], preferred_element_type=jnp.float32) + b3_ref[...]
    o_ref[...] = out.astype(o_ref.dtype)


def proj_mlp(embed, w1, b1, w2, b2, w3, b3):
    """embed: [B, 2048] bf16/f32 -> padded logits [Bp, Cp] float32."""
    B, K = embed.shape
    Hp = w1.shape[1]
    Cp = w3.shape[1]

    tm, Bp = _pick_batch_tile(B)
    if Bp != B:
        embed = jnp.pad(embed, ((0, Bp - B), (0, 0)))
    grid = (Bp // tm,)

    flops = 2 * Bp * (K * Hp + Hp * Hp + Hp * Cp)
    bytes_accessed = (
        embed.size * embed.dtype.itemsize
        + sum(a.size * a.dtype.itemsize for a in (w1, b1, w2, b2, w3, b3))
        + Bp * Cp * 4
    )

    # Weights/biases are grid-invariant (constant index_map): DMA'd once and
    # kept resident; single-buffer them so they only cost 1x their size in VMEM.
    resident = functools.partial(pl.BlockSpec, pipeline_mode=pl.Buffered(1))

    return pl.pallas_call(
        _proj_mlp_kernel,
        out_shape=jax.ShapeDtypeStruct((Bp, Cp), jnp.float32),
        grid=grid,
        in_specs=[
            pl.BlockSpec((tm, K), lambda i: (i, 0)),   # embed tile per step (pipelined)
            resident(w1.shape, lambda i: (0, 0)),
            resident(b1.shape, lambda i: (0, 0)),
            resident(w2.shape, lambda i: (0, 0)),
            resident(b2.shape, lambda i: (0, 0)),
            resident(w3.shape, lambda i: (0, 0)),
            resident(b3.shape, lambda i: (0, 0)),
        ],
        out_specs=pl.BlockSpec((tm, Cp), lambda i: (i, 0)),  # lane-dense writeback
        compiler_params=pltpu.CompilerParams(
            dimension_semantics=("parallel",),          # megacore sharding on v7x
            vmem_limit_bytes=_vmem_limit_bytes(),
        ),
        cost_estimate=pl.CostEstimate(
            flops=flops, transcendentals=0, bytes_accessed=bytes_accessed
        ),
    )(embed, w1, b1, w2, b2, w3, b3)


def init_panns_params(key, num_classes, hidden_dim):
    """Shapes match the PyTorch `proj` Sequential; weights are pre-transposed,
    zero-padded to lane/MXU multiples, and stored in bf16 (biases stay f32)."""
    Hp = _lane_pad(hidden_dim)
    Cp = _lane_pad(num_classes)

    def linear(kw, kb, fan_in, fan_out, in_pad, out_pad):
        bound = 1.0 / math.sqrt(fan_in)  # PyTorch nn.Linear default init bounds
        w = jax.random.uniform(
            kw, (fan_in, fan_out), minval=-bound, maxval=bound, dtype=jnp.float32
        )
        b = jax.random.uniform(
            kb, (1, fan_out), minval=-bound, maxval=bound, dtype=jnp.float32
        )
        w = jnp.pad(w, ((0, in_pad - fan_in), (0, out_pad - fan_out)))
        b = jnp.pad(b, ((0, 0), (0, out_pad - fan_out)))
        return w.astype(jnp.bfloat16), b  # zero-padding keeps the math exact

    k1w, k1b, k2w, k2b, k3w, k3b = jax.random.split(key, 6)
    w1, b1 = linear(k1w, k1b, EMBED_DIM, hidden_dim, EMBED_DIM, Hp)
    w2, b2 = linear(k2w, k2b, hidden_dim, hidden_dim, Hp, Hp)
    w3, b3 = linear(k3w, k3b, hidden_dim, num_classes, Hp, Cp)
    return (w1, b1, w2, b2, w3, b3)


def panns_forward(x, params, sample_rate, num_classes):
    """Forward pass of the PANNs classifier.  x: [B, T] float32 waveform."""
    # self.resample = torchaudio.transforms.Resample(sample_rate, 32000):
    # with sample_rate == 32000 torchaudio returns the waveform unchanged.
    # TODO(synk): arbitrary-rate polyphase resampling is not implemented.
    assert float(sample_rate) == 32000.0, "only the identity-resample case is implemented"

    B = x.shape[0]
    x_flat = x.reshape(B, -1)  # x.view(x.shape[0], -1)
    n = x_flat.shape[1]
    assert n % EMBED_DIM == 0, "stand-in embedding requires n_samples % 2048 == 0"
    T = n // EMBED_DIM

    # TODO(synk): panns_hear.get_scene_embeddings uses a pretrained CNN14
    # backbone ('hear2021-panns_hear.pth') with no in-script equivalent.
    # Deterministic stand-in: mean-pool each of 2048 contiguous bins, written
    # as one reshape + reduce so XLA makes a single fused pass over x (the
    # waveform read dominates HBM traffic); 1/T scale fuses into the reduce.
    embed = jnp.mean(x_flat.reshape(B, EMBED_DIM, T), axis=-1).astype(jnp.bfloat16)

    # self.proj — fused, batch-tiled Pallas kernel; slice off lane/batch padding.
    logits = proj_mlp(embed, *params)
    return logits[:B, :num_classes]


if __name__ == "__main__":
    key = jax.random.PRNGKey(0)
    k_params, k_x = jax.random.split(key)

    # Small, module-consistent shapes.
    batch = 2
    num_classes = 8
    hidden_dim = 32
    sample_rate = 32000.0
    n_samples = EMBED_DIM * 4  # 8192 audio samples per example

    params = init_panns_params(k_params, num_classes, hidden_dim)
    x = jax.random.normal(k_x, (batch, n_samples), dtype=jnp.float32)

    fwd = jax.jit(
        functools.partial(panns_forward, sample_rate=sample_rate, num_classes=num_classes)
    )
    logits = fwd(x, params)
    logits = jax.block_until_ready(logits)

    assert logits.shape == (batch, num_classes), logits.shape
    assert logits.dtype == jnp.float32
    assert bool(jnp.all(jnp.isfinite(logits)))
    print("KERNEL_OK")
</pallas_src>

<mosaic_0001>
module attributes {stable_mosaic.version = 11 : i64} {
  func.func @_proj_mlp_kernel(%arg0: i32, %arg1: memref<8x2048xbf16, #tpu.memory_space<vmem>>, %arg2: memref<2048x128xbf16, #tpu.memory_space<vmem>>, %arg3: memref<1x128xf32, #tpu.memory_space<vmem>>, %arg4: memref<128x128xbf16, #tpu.memory_space<vmem>>, %arg5: memref<1x128xf32, #tpu.memory_space<vmem>>, %arg6: memref<128x128xbf16, #tpu.memory_space<vmem>>, %arg7: memref<1x128xf32, #tpu.memory_space<vmem>>, %arg8: memref<8x128xf32, #tpu.memory_space<vmem>>) attributes {dimension_semantics = [#tpu.dimension_semantics<parallel>], iteration_bounds = array<i64: 1>, scalar_prefetch = 0 : i64, scratch_operands = 0 : i64, tpu.core_type = #tpu.core_type<tc>, window_params = [{transform_indices = @transform_0, window_bounds = array<i64: 8, 2048>}, {pipeline_mode = #tpu.pipeline_mode<synchronous>, transform_indices = @transform_1, window_bounds = array<i64: 2048, 128>}, {pipeline_mode = #tpu.pipeline_mode<synchronous>, transform_indices = @transform_2, window_bounds = array<i64: 1, 128>}, {pipeline_mode = #tpu.pipeline_mode<synchronous>, transform_indices = @transform_3, window_bounds = array<i64: 128, 128>}, {pipeline_mode = #tpu.pipeline_mode<synchronous>, transform_indices = @transform_4, window_bounds = array<i64: 1, 128>}, {pipeline_mode = #tpu.pipeline_mode<synchronous>, transform_indices = @transform_5, window_bounds = array<i64: 128, 128>}, {pipeline_mode = #tpu.pipeline_mode<synchronous>, transform_indices = @transform_6, window_bounds = array<i64: 1, 128>}, {transform_indices = @transform_7, window_bounds = array<i64: 8, 128>}]} {
    %c0 = arith.constant 0 : index
    %c0_0 = arith.constant 0 : index
    %0 = vector.load %arg1[%c0, %c0_0] : memref<8x2048xbf16, #tpu.memory_space<vmem>>, vector<8x2048xbf16>
    %c0_1 = arith.constant 0 : index
    %c0_2 = arith.constant 0 : index
    %1 = vector.load %arg2[%c0_1, %c0_2] : memref<2048x128xbf16, #tpu.memory_space<vmem>>, vector<2048x128xbf16>
    %cst = arith.constant dense<0.000000e+00> : vector<8x128xf32>
    %2 = tpu.matmul %0, %1, %cst {dimension_numbers = #tpu.dot_dimension_numbers<[1], [0], [0], [1], [0, 0, 1, 1], [], []>} : vector<8x2048xbf16>, vector<2048x128xbf16>, vector<8x128xf32> -> vector<8x128xf32>
    %c0_3 = arith.constant 0 : index
    %c0_4 = arith.constant 0 : index
    %3 = vector.load %arg3[%c0_3, %c0_4] : memref<1x128xf32, #tpu.memory_space<vmem>>, vector<1x128xf32>
    %4 = vector.broadcast %3 : vector<1x128xf32> to vector<8x128xf32>
    %5 = arith.addf %2, %4 : vector<8x128xf32>
    %cst_5 = arith.constant 0.000000e+00 : f32
    %6 = vector.broadcast %cst_5 : f32 to vector<8x128xf32>
    %7 = arith.maximumf %5, %6 : vector<8x128xf32>
    %8 = arith.truncf %7 : vector<8x128xf32> to vector<8x128xbf16>
    %c0_6 = arith.constant 0 : index
    %c0_7 = arith.constant 0 : index
    %9 = vector.load %arg4[%c0_6, %c0_7] : memref<128x128xbf16, #tpu.memory_space<vmem>>, vector<128x128xbf16>
    %cst_8 = arith.constant dense<0.000000e+00> : vector<8x128xf32>
    %10 = tpu.matmul %8, %9, %cst_8 {dimension_numbers = #tpu.dot_dimension_numbers<[1], [0], [0], [1], [0, 0, 1, 1], [], []>} : vector<8x128xbf16>, vector<128x128xbf16>, vector<8x128xf32> -> vector<8x128xf32>
    %c0_9 = arith.constant 0 : index
    %c0_10 = arith.constant 0 : index
    %11 = vector.load %arg5[%c0_9, %c0_10] : memref<1x128xf32, #tpu.memory_space<vmem>>, vector<1x128xf32>
    %12 = vector.broadcast %11 : vector<1x128xf32> to vector<8x128xf32>
    %13 = arith.addf %10, %12 : vector<8x128xf32>
    %cst_11 = arith.constant 0.000000e+00 : f32
    %14 = vector.broadcast %cst_11 : f32 to vector<8x128xf32>
    %15 = arith.maximumf %13, %14 : vector<8x128xf32>
    %16 = arith.truncf %15 : vector<8x128xf32> to vector<8x128xbf16>
    %c0_12 = arith.constant 0 : index
    %c0_13 = arith.constant 0 : index
    %17 = vector.load %arg6[%c0_12, %c0_13] : memref<128x128xbf16, #tpu.memory_space<vmem>>, vector<128x128xbf16>
    %cst_14 = arith.constant dense<0.000000e+00> : vector<8x128xf32>
    %18 = tpu.matmul %16, %17, %cst_14 {dimension_numbers = #tpu.dot_dimension_numbers<[1], [0], [0], [1], [0, 0, 1, 1], [], []>} : vector<8x128xbf16>, vector<128x128xbf16>, vector<8x128xf32> -> vector<8x128xf32>
    %c0_15 = arith.constant 0 : index
    %c0_16 = arith.constant 0 : index
    %19 = vector.load %arg7[%c0_15, %c0_16] : memref<1x128xf32, #tpu.memory_space<vmem>>, vector<1x128xf32>
    %20 = vector.broadcast %19 : vector<1x128xf32> to vector<8x128xf32>
    %21 = arith.addf %18, %20 : vector<8x128xf32>
    %c0_17 = arith.constant 0 : index
    %c0_18 = arith.constant 0 : index
    %22 = vector.load %arg8[%c0_17, %c0_18] : memref<8x128xf32, #tpu.memory_space<vmem>>, vector<8x128xf32>
    tpu.vector_store %arg8[%c0_17, %c0_18], %21 {strides = array<i32>} : memref<8x128xf32, #tpu.memory_space<vmem>>, vector<8x128xf32>,
    return
  }
  func.func @transform_0(%arg0: i32) -> (i32, i32) {
    %c0_i32 = arith.constant 0 : i32
    %c0_i32_0 = arith.constant 0 : i32
    return %arg0, %c0_i32 : i32, i32
  }
  func.func @transform_1(%arg0: i32) -> (i32, i32) {
    %c0_i32 = arith.constant 0 : i32
    %c0_i32_0 = arith.constant 0 : i32
    %c0_i32_1 = arith.constant 0 : i32
    return %c0_i32, %c0_i32_0 : i32, i32
  }
  func.func @transform_2(%arg0: i32) -> (i32, i32) {
    %c0_i32 = arith.constant 0 : i32
    %c0_i32_0 = arith.constant 0 : i32
    %c0_i32_1 = arith.constant 0 : i32
    return %c0_i32, %c0_i32_0 : i32, i32
  }
  func.func @transform_3(%arg0: i32) -> (i32, i32) {
    %c0_i32 = arith.constant 0 : i32
    %c0_i32_0 = arith.constant 0 : i32
    %c0_i32_1 = arith.constant 0 : i32
    return %c0_i32, %c0_i32_0 : i32, i32
  }
  func.func @transform_4(%arg0: i32) -> (i32, i32) {
    %c0_i32 = arith.constant 0 : i32
    %c0_i32_0 = arith.constant 0 : i32
    %c0_i32_1 = arith.constant 0 : i32
    return %c0_i32, %c0_i32_0 : i32, i32
  }
  func.func @transform_5(%arg0: i32) -> (i32, i32) {
    %c0_i32 = arith.constant 0 : i32
    %c0_i32_0 = arith.constant 0 : i32
    %c0_i32_1 = arith.constant 0 : i32
    return %c0_i32, %c0_i32_0 : i32, i32
  }
  func.func @transform_6(%arg0: i32) -> (i32, i32) {
    %c0_i32 = arith.constant 0 : i32
    %c0_i32_0 = arith.constant 0 : i32
    %c0_i32_1 = arith.constant 0 : i32
    return %c0_i32, %c0_i32_0 : i32, i32
  }
  func.func @transform_7(%arg0: i32) -> (i32, i32) {
    %c0_i32 = arith.constant 0 : i32
    %c0_i32_0 = arith.constant 0 : i32
    return %arg0, %c0_i32 : i32, i32
  }
}

</mosaic_0001>

<llo_original>
// kernel: panns_forward.1
$region0: #{panns_forward.1}
  #allocation0 [shape = 'u32[]', space=smem, size = 0x4, offset = 0x4, fixed_abs, tag = 'smem constant byte address 0x4 - core index']
  #allocation1 [shape = 'u32[72,128]{1,0:T(1,128)}', space=vmem, size = 0x9000, scoped, tag = 'internal scratch']
  %s0 = inlined_call_operand.vmem [shape: bf16[8,2048], index: 0, kind: input, shape index: {}]
  %s1 = inlined_call_operand.vmem [shape: bf16[2048,128], index: 1, kind: input, shape index: {}]
  %s2 = inlined_call_operand.vmem [shape: f32[1,128], index: 2, kind: input, shape index: {}]
  %s3 = inlined_call_operand.vmem [shape: bf16[128,128], index: 3, kind: input, shape index: {}]
  %s4 = inlined_call_operand.vmem [shape: f32[1,128], index: 4, kind: input, shape index: {}]
  %s5 = inlined_call_operand.vmem [shape: bf16[128,128], index: 5, kind: input, shape index: {}]
  %s6 = inlined_call_operand.vmem [shape: f32[1,128], index: 6, kind: input, shape index: {}]
  %s7 = inlined_call_operand.vmem [shape: f32[8,128], index: 7, kind: output, shape index: {}]
  %s8 = sld [smem:[#allocation0]]
  $region38: #{panns_forward.1} parent=0
    _
  %s10 = ssub.s32 1, %s8
  %s11 = scalar_select 0, %s10, %s8
  // Predicated region
  $region2: #{panns_forward.1} parent=0 // pred_check
    _
  $region3: #{panns_forward.1} parent=0 // pred_check_branch
    %13 = sbr.rel (0) target = $region5
  $region4: #{panns_forward.1} parent=0 // pred_region
    _
  $region5: #{panns_forward.1} parent=0 // pred_fallthru
    _
  // Predicated region
  $region6: #{panns_forward.1} parent=0 // pred_check
    _
  $region7: #{panns_forward.1} parent=0 // pred_check_branch
    %15 = sbr.rel (0) target = $region9
  $region8: #{panns_forward.1} parent=0 // pred_region
    _
  $region9: #{panns_forward.1} parent=0 // pred_fallthru
    _
  // Predicated region
  $region10: #{panns_forward.1} parent=0 // pred_check
    _
  $region11: #{panns_forward.1} parent=0 // pred_check_branch
    %17 = sbr.rel (0) target = $region13
  $region12: #{panns_forward.1} parent=0 // pred_region
    _
  $region13: #{panns_forward.1} parent=0 // pred_fallthru
    _
  // Predicated region
  $region14: #{panns_forward.1} parent=0 // pred_check
    _
  $region15: #{panns_forward.1} parent=0 // pred_check_branch
    %19 = sbr.rel (0) target = $region17
  $region16: #{panns_forward.1} parent=0 // pred_region
    _
  $region17: #{panns_forward.1} parent=0 // pred_fallthru
    _
  // Predicated region
  $region18: #{panns_forward.1} parent=0 // pred_check
    _
  $region19: #{panns_forward.1} parent=0 // pred_check_branch
    %21 = sbr.rel (0) target = $region21
  $region20: #{panns_forward.1} parent=0 // pred_region
    _
  $region21: #{panns_forward.1} parent=0 // pred_fallthru
    _
  // Predicated region
  $region22: #{panns_forward.1} parent=0 // pred_check
    _
  $region23: #{panns_forward.1} parent=0 // pred_check_branch
    %23 = sbr.rel (0) target = $region25
  $region24: #{panns_forward.1} parent=0 // pred_region
    _
  $region25: #{panns_forward.1} parent=0 // pred_fallthru
    _
  // Predicated region
  $region26: #{panns_forward.1} parent=0 // pred_check
    _
  $region27: #{panns_forward.1} parent=0 // pred_check_branch
    %25 = sbr.rel (0) target = $region29
  $region28: #{panns_forward.1} parent=0 // pred_region
    _
  $region29: #{panns_forward.1} parent=0 // pred_fallthru
    _
  %v26 = vld [vmem:[%s0] sm:$0xff]
  %v27 = vld [vmem:[%s0 + $0x8] sm:$0xff]
  %v28 = vld [vmem:[%s0 + $0x10] sm:$0xff]
  %v29 = vld [vmem:[%s0 + $0x18] sm:$0xff]
  %v30 = vld [vmem:[%s0 + $0x20] sm:$0xff]
  %v31 = vld [vmem:[%s0 + $0x28] sm:$0xff]
  %v32 = vld [vmem:[%s0 + $0x30] sm:$0xff]
  %v33 = vld [vmem:[%s0 + $0x38] sm:$0xff]
  %v34 = vld [vmem:[%s1] sm:$0xf]
  %v35 = vld [vmem:[%s1 + $0x4] sm:$0xf]
  %v36 = vld [vmem:[%s1 + $0x8] sm:$0xf]
  %v37 = vld [vmem:[%s1 + $0xc] sm:$0xf]
  %v38 = vld [vmem:[%s1 + $0x10] sm:$0xf]
  %v39 = vld [vmem:[%s1 + $0x14] sm:$0xf]
  %v40 = vld [vmem:[%s1 + $0x18] sm:$0xf]
  %v41 = vld [vmem:[%s1 + $0x1c] sm:$0xf]
  %v42 = vld [vmem:[%s1 + $0x20] sm:$0xf]
  %v43 = vld [vmem:[%s1 + $0x24] sm:$0xf]
  %v44 = vld [vmem:[%s1 + $0x28] sm:$0xf]
  %v45 = vld [vmem:[%s1 + $0x2c] sm:$0xf]
  %v46 = vld [vmem:[%s1 + $0x30] sm:$0xf]
  %v47 = vld [vmem:[%s1 + $0x34] sm:$0xf]
  %v48 = vld [vmem:[%s1 + $0x38] sm:$0xf]
  %v49 = vld [vmem:[%s1 + $0x3c] sm:$0xf]
  %v50 = vld [vmem:[%s1 + $0x40] sm:$0xf]
  %v51 = vld [vmem:[%s1 + $0x44] sm:$0xf]
  %v52 = vld [vmem:[%s1 + $0x48] sm:$0xf]
  %v53 = vld [vmem:[%s1 + $0x4c] sm:$0xf]
  %v54 = vld [vmem:[%s1 + $0x50] sm:$0xf]
  %v55 = vld [vmem:[%s1 + $0x54] sm:$0xf]
  %v56 = vld [vmem:[%s1 + $0x58] sm:$0xf]
  %v57 = vld [vmem:[%s1 + $0x5c] sm:$0xf]
  %v58 = vld [vmem:[%s1 + $0x60] sm:$0xf]
  %v59 = vld [vmem:[%s1 + $0x64] sm:$0xf]
  %v60 = vld [vmem:[%s1 + $0x68] sm:$0xf]
  %v61 = vld [vmem:[%s1 + $0x6c] sm:$0xf]
  %v62 = vld [vmem:[%s1 + $0x70] sm:$0xf]
  %v63 = vld [vmem:[%s1 + $0x74] sm:$0xf]
  %v64 = vld [vmem:[%s1 + $0x78] sm:$0xf]
  %v65 = vld [vmem:[%s1 + $0x7c] sm:$0xf]
  %v66 = vld [vmem:[%s1 + $0x80] sm:$0xf]
  %v67 = vld [vmem:[%s1 + $0x84] sm:$0xf]
  %v68 = vld [vmem:[%s1 + $0x88] sm:$0xf]
  %v69 = vld [vmem:[%s1 + $0x8c] sm:$0xf]
  %v70 = vld [vmem:[%s1 + $0x90] sm:$0xf]
  %v71 = vld [vmem:[%s1 + $0x94] sm:$0xf]
  %v72 = vld [vmem:[%s1 + $0x98] sm:$0xf]
  %v73 = vld [vmem:[%s1 + $0x9c] sm:$0xf]
  %v74 = vld [vmem:[%s1 + $0xa0] sm:$0xf]
  %v75 = vld [vmem:[%s1 + $0xa4] sm:$0xf]
  %v76 = vld [vmem:[%s1 + $0xa8] sm:$0xf]
  %v77 = vld [vmem:[%s1 + $0xac] sm:$0xf]
  %v78 = vld [vmem:[%s1 + $0xb0] sm:$0xf]
  %v79 = vld [vmem:[%s1 + $0xb4] sm:$0xf]
  %v80 = vld [vmem:[%s1 + $0xb8] sm:$0xf]
  %v81 = vld [vmem:[%s1 + $0xbc] sm:$0xf]
  %v82 = vld [vmem:[%s1 + $0xc0] sm:$0xf]
  %v83 = vld [vmem:[%s1 + $0xc4] sm:$0xf]
  %v84 = vld [vmem:[%s1 + $0xc8] sm:$0xf]
  %v85 = vld [vmem:[%s1 + $0xcc] sm:$0xf]
  %v86 = vld [vmem:[%s1 + $0xd0] sm:$0xf]
  %v87 = vld [vmem:[%s1 + $0xd4] sm:$0xf]
  %v88 = vld [vmem:[%s1 + $0xd8] sm:$0xf]
  %v89 = vld [vmem:[%s1 + $0xdc] sm:$0xf]
  %v90 = vld [vmem:[%s1 + $0xe0] sm:$0xf]
  %v91 = vld [vmem:[%s1 + $0xe4] sm:$0xf]
  %v92 = vld [vmem:[%s1 + $0xe8] sm:$0xf]
  %v93 = vld [vmem:[%s1 + $0xec] sm:$0xf]
  %v94 = vld [vmem:[%s1 + $0xf0] sm:$0xf]
  %v95 = vld [vmem:[%s1 + $0xf4] sm:$0xf]
  %v96 = vld [vmem:[%s1 + $0xf8] sm:$0xf]
  %v97 = vld [vmem:[%s1 + $0xfc] sm:$0xf]
  %v98 = vld [vmem:[%s1 + $0x100] sm:$0xf]
  %v99 = vld [vmem:[%s1 + $0x104] sm:$0xf]
  %v100 = vld [vmem:[%s1 + $0x108] sm:$0xf]
  %v101 = vld [vmem:[%s1 + $0x10c] sm:$0xf]
  %v102 = vld [vmem:[%s1 + $0x110] sm:$0xf]
  %v103 = vld [vmem:[%s1 + $0x114] sm:$0xf]
  %v104 = vld [vmem:[%s1 + $0x118] sm:$0xf]
  %v105 = vld [vmem:[%s1 + $0x11c] sm:$0xf]
  %v106 = vld [vmem:[%s1 + $0x120] sm:$0xf]
  %v107 = vld [vmem:[%s1 + $0x124] sm:$0xf]
  %v108 = vld [vmem:[%s1 + $0x128] sm:$0xf]
  %v109 = vld [vmem:[%s1 + $0x12c] sm:$0xf]
  %v110 = vld [vmem:[%s1 + $0x130] sm:$0xf]
  %v111 = vld [vmem:[%s1 + $0x134] sm:$0xf]
  %v112 = vld [vmem:[%s1 + $0x138] sm:$0xf]
  %v113 = vld [vmem:[%s1 + $0x13c] sm:$0xf]
  %v114 = vld [vmem:[%s1 + $0x140] sm:$0xf]
  %v115 = vld [vmem:[%s1 + $0x144] sm:$0xf]
  %v116 = vld [vmem:[%s1 + $0x148] sm:$0xf]
  %v117 = vld [vmem:[%s1 + $0x14c] sm:$0xf]
  %v118 = vld [vmem:[%s1 + $0x150] sm:$0xf]
  %v119 = vld [vmem:[%s1 + $0x154] sm:$0xf]
  %v120 = vld [vmem:[%s1 + $0x158] sm:$0xf]
  %v121 = vld [vmem:[%s1 + $0x15c] sm:$0xf]
  %v122 = vld [vmem:[%s1 + $0x160] sm:$0xf]
  %v123 = vld [vmem:[%s1 + $0x164] sm:$0xf]
  %v124 = vld [vmem:[%s1 + $0x168] sm:$0xf]
  %v125 = vld [vmem:[%s1 + $0x16c] sm:$0xf]
  %v126 = vld [vmem:[%s1 + $0x170] sm:$0xf]
  %v127 = vld [vmem:[%s1 + $0x174] sm:$0xf]
  %v128 = vld [vmem:[%s1 + $0x178] sm:$0xf]
  %v129 = vld [vmem:[%s1 + $0x17c] sm:$0xf]
  %v130 = vld [vmem:[%s1 + $0x180] sm:$0xf]
  %v131 = vld [vmem:[%s1 + $0x184] sm:$0xf]
  %v132 = vld [vmem:[%s1 + $0x188] sm:$0xf]
  %v133 = vld [vmem:[%s1 + $0x18c] sm:$0xf]
  %v134 = vld [vmem:[%s1 + $0x190] sm:$0xf]
  %v135 = vld [vmem:[%s1 + $0x194] sm:$0xf]
  %v136 = vld [vmem:[%s1 + $0x198] sm:$0xf]
  %v137 = vld [vmem:[%s1 + $0x19c] sm:$0xf]
  %v138 = vld [vmem:[%s1 + $0x1a0] sm:$0xf]
  %v139 = vld [vmem:[%s1 + $0x1a4] sm:$0xf]
  %v140 = vld [vmem:[%s1 + $0x1a8] sm:$0xf]
  %v141 = vld [vmem:[%s1 + $0x1ac] sm:$0xf]
  %v142 = vld [vmem:[%s1 + $0x1b0] sm:$0xf]
  %v143 = vld [vmem:[%s1 + $0x1b4] sm:$0xf]
  %v144 = vld [vmem:[%s1 + $0x1b8] sm:$0xf]
  %v145 = vld [vmem:[%s1 + $0x1bc] sm:$0xf]
  %v146 = vld [vmem:[%s1 + $0x1c0] sm:$0xf]
  %v147 = vld [vmem:[%s1 + $0x1c4] sm:$0xf]
  %v148 = vld [vmem:[%s1 + $0x1c8] sm:$0xf]
  %v149 = vld [vmem:[%s1 + $0x1cc] sm:$0xf]
  %v150 = vld [vmem:[%s1 + $0x1d0] sm:$0xf]
  %v151 = vld [vmem:[%s1 + $0x1d4] sm:$0xf]
  %v152 = vld [vmem:[%s1 + $0x1d8] sm:$0xf]
  %v153 = vld [vmem:[%s1 + $0x1dc] sm:$0xf]
  %v154 = vld [vmem:[%s1 + $0x1e0] sm:$0xf]
  %v155 = vld [vmem:[%s1 + $0x1e4] sm:$0xf]
  %v156 = vld [vmem:[%s1 + $0x1e8] sm:$0xf]
  %v157 = vld [vmem:[%s1 + $0x1ec] sm:$0xf]
  %v158 = vld [vmem:[%s1 + $0x1f0] sm:$0xf]
  %v159 = vld [vmem:[%s1 + $0x1f4] sm:$0xf]
  %v160 = vld [vmem:[%s1 + $0x1f8] sm:$0xf]
  %v161 = vld [vmem:[%s1 + $0x1fc] sm:$0xf]
  %v162 = vld [vmem:[%s1 + $0x200] sm:$0xf]
  %v163 = vld [vmem:[%s1 + $0x204] sm:$0xf]
  %v164 = vld [vmem:[%s1 + $0x208] sm:$0xf]
  %v165 = vld [vmem:[%s1 + $0x20c] sm:$0xf]
  %v166 = vld [vmem:[%s1 + $0x210] sm:$0xf]
  %v167 = vld [vmem:[%s1 + $0x214] sm:$0xf]
  %v168 = vld [vmem:[%s1 + $0x218] sm:$0xf]
  %v169 = vld [vmem:[%s1 + $0x21c] sm:$0xf]
  %v170 = vld [vmem:[%s1 + $0x220] sm:$0xf]
  %v171 = vld [vmem:[%s1 + $0x224] sm:$0xf]
  %v172 = vld [vmem:[%s1 + $0x228] sm:$0xf]
  %v173 = vld [vmem:[%s1 + $0x22c] sm:$0xf]
  %v174 = vld [vmem:[%s1 + $0x230] sm:$0xf]
  %v175 = vld [vmem:[%s1 + $0x234] sm:$0xf]
  %v176 = vld [vmem:[%s1 + $0x238] sm:$0xf]
  %v177 = vld [vmem:[%s1 + $0x23c] sm:$0xf]
  %v178 = vld [vmem:[%s1 + $0x240] sm:$0xf]
  %v179 = vld [vmem:[%s1 + $0x244] sm:$0xf]
  %v180 = vld [vmem:[%s1 + $0x248] sm:$0xf]
  %v181 = vld [vmem:[%s1 + $0x24c] sm:$0xf]
  %v182 = vld [vmem:[%s1 + $0x250] sm:$0xf]
  %v183 = vld [vmem:[%s1 + $0x254] sm:$0xf]
  %v184 = vld [vmem:[%s1 + $0x258] sm:$0xf]
  %v185 = vld [vmem:[%s1 + $0x25c] sm:$0xf]
  %v186 = vld [vmem:[%s1 + $0x260] sm:$0xf]
  %v187 = vld [vmem:[%s1 + $0x264] sm:$0xf]
  %v188 = vld [vmem:[%s1 + $0x268] sm:$0xf]
  %v189 = vld [vmem:[%s1 + $0x26c] sm:$0xf]
  %v190 = vld [vmem:[%s1 + $0x270] sm:$0xf]
  %v191 = vld [vmem:[%s1 + $0x274] sm:$0xf]
  %v192 = vld [vmem:[%s1 + $0x278] sm:$0xf]
  %v193 = vld [vmem:[%s1 + $0x27c] sm:$0xf]
  %v194 = vld [vmem:[%s1 + $0x280] sm:$0xf]
  %v195 = vld [vmem:[%s1 + $0x284] sm:$0xf]
  %v196 = vld [vmem:[%s1 + $0x288] sm:$0xf]
  %v197 = vld [vmem:[%s1 + $0x28c] sm:$0xf]
  %v198 = vld [vmem:[%s1 + $0x290] sm:$0xf]
  %v199 = vld [vmem:[%s1 + $0x294] sm:$0xf]
  %v200 = vld [vmem:[%s1 + $0x298] sm:$0xf]
  %v201 = vld [vmem:[%s1 + $0x29c] sm:$0xf]
  %v202 = vld [vmem:[%s1 + $0x2a0] sm:$0xf]
  %v203 = vld [vmem:[%s1 + $0x2a4] sm:$0xf]
  %v204 = vld [vmem:[%s1 + $0x2a8] sm:$0xf]
  %v205 = vld [vmem:[%s1 + $0x2ac] sm:$0xf]
  %v206 = vld [vmem:[%s1 + $0x2b0] sm:$0xf]
  %v207 = vld [vmem:[%s1 + $0x2b4] sm:$0xf]
  %v208 = vld [vmem:[%s1 + $0x2b8] sm:$0xf]
  %v209 = vld [vmem:[%s1 + $0x2bc] sm:$0xf]
  %v210 = vld [vmem:[%s1 + $0x2c0] sm:$0xf]
  %v211 = vld [vmem:[%s1 + $0x2c4] sm:$0xf]
  %v212 = vld [vmem:[%s1 + $0x2c8] sm:$0xf]
  %v213 = vld [vmem:[%s1 + $0x2cc] sm:$0xf]
  %v214 = vld [vmem:[%s1 + $0x2d0] sm:$0xf]
  %v215 = vld [vmem:[%s1 + $0x2d4] sm:$0xf]
  %v216 = vld [vmem:[%s1 + $0x2d8] sm:$0xf]
  %v217 = vld [vmem:[%s1 + $0x2dc] sm:$0xf]
  %v218 = vld [vmem:[%s1 + $0x2e0] sm:$0xf]
  %v219 = vld [vmem:[%s1 + $0x2e4] sm:$0xf]
  %v220 = vld [vmem:[%s1 + $0x2e8] sm:$0xf]
  %v221 = vld [vmem:[%s1 + $0x2ec] sm:$0xf]
  %v222 = vld [vmem:[%s1 + $0x2f0] sm:$0xf]
  %v223 = vld [vmem:[%s1 + $0x2f4] sm:$0xf]
  %v224 = vld [vmem:[%s1 + $0x2f8] sm:$0xf]
  %v225 = vld [vmem:[%s1 + $0x2fc] sm:$0xf]
  %v226 = vld [vmem:[%s1 + $0x300] sm:$0xf]
  %v227 = vld [vmem:[%s1 + $0x304] sm:$0xf]
  %v228 = vld [vmem:[%s1 + $0x308] sm:$0xf]
  %v229 = vld [vmem:[%s1 + $0x30c] sm:$0xf]
  %v230 = vld [vmem:[%s1 + $0x310] sm:$0xf]
  %v231 = vld [vmem:[%s1 + $0x314] sm:$0xf]
  %v232 = vld [vmem:[%s1 + $0x318] sm:$0xf]
  %v233 = vld [vmem:[%s1 + $0x31c] sm:$0xf]
  %v234 = vld [vmem:[%s1 + $0x320] sm:$0xf]
  %v235 = vld [vmem:[%s1 + $0x324] sm:$0xf]
  %v236 = vld [vmem:[%s1 + $0x328] sm:$0xf]
  %v237 = vld [vmem:[%s1 + $0x32c] sm:$0xf]
  %v238 = vld [vmem:[%s1 + $0x330] sm:$0xf]
  %v239 = vld [vmem:[%s1 + $0x334] sm:$0xf]
  %v240 = vld [vmem:[%s1 + $0x338] sm:$0xf]
  %v241 = vld [vmem:[%s1 + $0x33c] sm:$0xf]
  %v242 = vld [vmem:[%s1 + $0x340] sm:$0xf]
  %v243 = vld [vmem:[%s1 + $0x344] sm:$0xf]
  %v244 = vld [vmem:[%s1 + $0x348] sm:$0xf]
  %v245 = vld [vmem:[%s1 + $0x34c] sm:$0xf]
  %v246 = vld [vmem:[%s1 + $0x350] sm:$0xf]
  %v247 = vld [vmem:[%s1 + $0x354] sm:$0xf]
  %v248 = vld [vmem:[%s1 + $0x358] sm:$0xf]
  %v249 = vld [vmem:[%s1 + $0x35c] sm:$0xf]
  %v250 = vld [vmem:[%s1 + $0x360] sm:$0xf]
  %v251 = vld [vmem:[%s1 + $0x364] sm:$0xf]
  %v252 = vld [vmem:[%s1 + $0x368] sm:$0xf]
  %v253 = vld [vmem:[%s1 + $0x36c] sm:$0xf]
  %v254 = vld [vmem:[%s1 + $0x370] sm:$0xf]
  %v255 = vld [vmem:[%s1 + $0x374] sm:$0xf]
  %v256 = vld [vmem:[%s1 + $0x378] sm:$0xf]
  %v257 = vld [vmem:[%s1 + $0x37c] sm:$0xf]
  %v258 = vld [vmem:[%s1 + $0x380] sm:$0xf]
  %v259 = vld [vmem:[%s1 + $0x384] sm:$0xf]
  %v260 = vld [vmem:[%s1 + $0x388] sm:$0xf]
  %v261 = vld [vmem:[%s1 + $0x38c] sm:$0xf]
  %v262 = vld [vmem:[%s1 + $0x390] sm:$0xf]
  %v263 = vld [vmem:[%s1 + $0x394] sm:$0xf]
  %v264 = vld [vmem:[%s1 + $0x398] sm:$0xf]
  %v265 = vld [vmem:[%s1 + $0x39c] sm:$0xf]
  %v266 = vld [vmem:[%s1 + $0x3a0] sm:$0xf]
  %v267 = vld [vmem:[%s1 + $0x3a4] sm:$0xf]
  %v268 = vld [vmem:[%s1 + $0x3a8] sm:$0xf]
  %v269 = vld [vmem:[%s1 + $0x3ac] sm:$0xf]
  %v270 = vld [vmem:[%s1 + $0x3b0] sm:$0xf]
  %v271 = vld [vmem:[%s1 + $0x3b4] sm:$0xf]
  %v272 = vld [vmem:[%s1 + $0x3b8] sm:$0xf]
  %v273 = vld [vmem:[%s1 + $0x3bc] sm:$0xf]
  %v274 = vld [vmem:[%s1 + $0x3c0] sm:$0xf]
  %v275 = vld [vmem:[%s1 + $0x3c4] sm:$0xf]
  %v276 = vld [vmem:[%s1 + $0x3c8] sm:$0xf]
  %v277 = vld [vmem:[%s1 + $0x3cc] sm:$0xf]
  %v278 = vld [vmem:[%s1 + $0x3d0] sm:$0xf]
  %v279 = vld [vmem:[%s1 + $0x3d4] sm:$0xf]
  %v280 = vld [vmem:[%s1 + $0x3d8] sm:$0xf]
  %v281 = vld [vmem:[%s1 + $0x3dc] sm:$0xf]
  %v282 = vld [vmem:[%s1 + $0x3e0] sm:$0xf]
  %v283 = vld [vmem:[%s1 + $0x3e4] sm:$0xf]
  %v284 = vld [vmem:[%s1 + $0x3e8] sm:$0xf]
  %v285 = vld [vmem:[%s1 + $0x3ec] sm:$0xf]
  %v286 = vld [vmem:[%s1 + $0x3f0] sm:$0xf]
  %v287 = vld [vmem:[%s1 + $0x3f4] sm:$0xf]
  %v288 = vld [vmem:[%s1 + $0x3f8] sm:$0xf]
  %v289 = vld [vmem:[%s1 + $0x3fc] sm:$0xf]
  %v290 = vld [vmem:[%s2] sm:$0x1]
  %v292 = vperm.slane %v290, 0
  %v302 = vunpack.c.l.b16 %v26
  %v303 = vunpack.c.h.b16 %v26
  %v304 = vunpack.c.l.b16 %v27
  %v305 = vunpack.c.h.b16 %v27
  %v306 = vunpack.c.l.b16 %v28
  %v307 = vunpack.c.h.b16 %v28
  %v308 = vunpack.c.l.b16 %v29
  %v309 = vunpack.c.h.b16 %v29
  %v310 = vunpack.c.l.b16 %v30
  %v311 = vunpack.c.h.b16 %v30
  %v312 = vunpack.c.l.b16 %v31
  %v313 = vunpack.c.h.b16 %v31
  %v314 = vunpack.c.l.b16 %v32
  %v315 = vunpack.c.h.b16 %v32
  %v316 = vunpack.c.l.b16 %v33
  %v317 = vunpack.c.h.b16 %v33
  %v318 = vpack.c.b16 %v302, %v302
  %v319 = vpack.c.b16 %v303, %v303
  %v320 = vpack.c.b16 %v304, %v304
  %v321 = vpack.c.b16 %v305, %v305
  %v322 = vpack.c.b16 %v306, %v306
  %v323 = vpack.c.b16 %v307, %v307
  %v324 = vpack.c.b16 %v308, %v308
  %v325 = vpack.c.b16 %v309, %v309
  %v326 = vpack.c.b16 %v310, %v310
  %v327 = vpack.c.b16 %v311, %v311
  %v328 = vpack.c.b16 %v312, %v312
  %v329 = vpack.c.b16 %v313, %v313
  %v330 = vpack.c.b16 %v314, %v314
  %v331 = vpack.c.b16 %v315, %v315
  %v332 = vpack.c.b16 %v316, %v316
  %v333 = vpack.c.b16 %v317, %v317
  %v606 = vunpack.c.l.b16 %v34
  %v607 = vunpack.c.l.b16 %v35
  %v608 = vunpack.c.l.b16 %v36
  %v609 = vunpack.c.l.b16 %v37
  %v610 = vunpack.c.l.b16 %v38
  %v611 = vunpack.c.l.b16 %v39
  %v612 = vunpack.c.l.b16 %v40
  %v613 = vunpack.c.l.b16 %v41
  %v614 = vunpack.c.l.b16 %v42
  %v615 = vunpack.c.l.b16 %v43
  %v616 = vunpack.c.l.b16 %v44
  %v617 = vunpack.c.l.b16 %v45
  %v618 = vunpack.c.l.b16 %v46
  %v619 = vunpack.c.l.b16 %v47
  %v620 = vunpack.c.l.b16 %v48
  %v621 = vunpack.c.l.b16 %v49
  %v622 = vunpack.c.l.b16 %v50
  %v623 = vunpack.c.l.b16 %v51
  %v624 = vunpack.c.l.b16 %v52
  %v625 = vunpack.c.l.b16 %v53
  %v626 = vunpack.c.l.b16 %v54
  %v627 = vunpack.c.l.b16 %v55
  %v628 = vunpack.c.l.b16 %v56
  %v629 = vunpack.c.l.b16 %v57
  %v630 = vunpack.c.l.b16 %v58
  %v631 = vunpack.c.l.b16 %v59
  %v632 = vunpack.c.l.b16 %v60
  %v633 = vunpack.c.l.b16 %v61
  %v634 = vunpack.c.l.b16 %v62
  %v635 = vunpack.c.l.b16 %v63
  %v636 = vunpack.c.l.b16 %v64
  %v637 = vunpack.c.l.b16 %v65
  %v638 = vunpack.c.l.b16 %v66
  %v639 = vunpack.c.l.b16 %v67
  %v640 = vunpack.c.l.b16 %v68
  %v641 = vunpack.c.l.b16 %v69
  %v642 = vunpack.c.l.b16 %v70
  %v643 = vunpack.c.l.b16 %v71
  %v644 = vunpack.c.l.b16 %v72
  %v645 = vunpack.c.l.b16 %v73
  %v646 = vunpack.c.l.b16 %v74
  %v647 = vunpack.c.l.b16 %v75
  %v648 = vunpack.c.l.b16 %v76
  %v649 = vunpack.c.l.b16 %v77
  %v650 = vunpack.c.l.b16 %v78
  %v651 = vunpack.c.l.b16 %v79
  %v652 = vunpack.c.l.b16 %v80
  %v653 = vunpack.c.l.b16 %v81
  %v654 = vunpack.c.l.b16 %v82
  %v655 = vunpack.c.l.b16 %v83
  %v656 = vunpack.c.l.b16 %v84
  %v657 = vunpack.c.l.b16 %v85
  %v658 = vunpack.c.l.b16 %v86
  %v659 = vunpack.c.l.b16 %v87
  %v660 = vunpack.c.l.b16 %v88
  %v661 = vunpack.c.l.b16 %v89
  %v662 = vunpack.c.l.b16 %v90
  %v663 = vunpack.c.l.b16 %v91
  %v664 = vunpack.c.l.b16 %v92
  %v665 = vunpack.c.l.b16 %v93
  %v666 = vunpack.c.l.b16 %v94
  %v667 = vunpack.c.l.b16 %v95
  %v668 = vunpack.c.l.b16 %v96
  %v669 = vunpack.c.l.b16 %v97
  %v670 = vunpack.c.l.b16 %v98
  %v671 = vunpack.c.l.b16 %v99
  %v672 = vunpack.c.l.b16 %v100
  %v673 = vunpack.c.l.b16 %v101
  %v674 = vunpack.c.l.b16 %v102
  %v675 = vunpack.c.l.b16 %v103
  %v676 = vunpack.c.l.b16 %v104
  %v677 = vunpack.c.l.b16 %v105
  %v678 = vunpack.c.l.b16 %v106
  %v679 = vunpack.c.l.b16 %v107
  %v680 = vunpack.c.l.b16 %v108
  %v681 = vunpack.c.l.b16 %v109
  %v682 = vunpack.c.l.b16 %v110
  %v683 = vunpack.c.l.b16 %v111
  %v684 = vunpack.c.l.b16 %v112
  %v685 = vunpack.c.l.b16 %v113
  %v686 = vunpack.c.l.b16 %v114
  %v687 = vunpack.c.l.b16 %v115
  %v688 = vunpack.c.l.b16 %v116
  %v689 = vunpack.c.l.b16 %v117
  %v690 = vunpack.c.l.b16 %v118
  %v691 = vunpack.c.l.b16 %v119
  %v692 = vunpack.c.l.b16 %v120
  %v693 = vunpack.c.l.b16 %v121
  %v694 = vunpack.c.l.b16 %v122
  %v695 = vunpack.c.l.b16 %v123
  %v696 = vunpack.c.l.b16 %v124
  %v697 = vunpack.c.l.b16 %v125
  %v698 = vunpack.c.l.b16 %v126
  %v699 = vunpack.c.l.b16 %v127
  %v700 = vunpack.c.l.b16 %v128
  %v701 = vunpack.c.l.b16 %v129
  %v702 = vunpack.c.l.b16 %v130
  %v703 = vunpack.c.l.b16 %v131
  %v704 = vunpack.c.l.b16 %v132
  %v705 = vunpack.c.l.b16 %v133
  %v706 = vunpack.c.l.b16 %v134
  %v707 = vunpack.c.l.b16 %v135
  %v708 = vunpack.c.l.b16 %v136
  %v709 = vunpack.c.l.b16 %v137
  %v710 = vunpack.c.l.b16 %v138
  %v711 = vunpack.c.l.b16 %v139
  %v712 = vunpack.c.l.b16 %v140
  %v713 = vunpack.c.l.b16 %v141
  %v714 = vunpack.c.l.b16 %v142
  %v715 = vunpack.c.l.b16 %v143
  %v716 = vunpack.c.l.b16 %v144
  %v717 = vunpack.c.l.b16 %v145
  %v718 = vunpack.c.l.b16 %v146
  %v719 = vunpack.c.l.b16 %v147
  %v720 = vunpack.c.l.b16 %v148
  %v721 = vunpack.c.l.b16 %v149
  %v722 = vunpack.c.l.b16 %v150
  %v723 = vunpack.c.l.b16 %v151
  %v724 = vunpack.c.l.b16 %v152
  %v725 = vunpack.c.l.b16 %v153
  %v726 = vunpack.c.l.b16 %v154
  %v727 = vunpack.c.l.b16 %v155
  %v728 = vunpack.c.l.b16 %v156
  %v729 = vunpack.c.l.b16 %v157
  %v730 = vunpack.c.l.b16 %v158
  %v731 = vunpack.c.l.b16 %v159
  %v732 = vunpack.c.l.b16 %v160
  %v733 = vunpack.c.l.b16 %v161
  %v734 = vunpack.c.l.b16 %v162
  %v735 = vunpack.c.l.b16 %v163
  %v736 = vunpack.c.l.b16 %v164
  %v737 = vunpack.c.l.b16 %v165
  %v738 = vunpack.c.l.b16 %v166
  %v739 = vunpack.c.l.b16 %v167
  %v740 = vunpack.c.l.b16 %v168
  %v741 = vunpack.c.l.b16 %v169
  %v742 = vunpack.c.l.b16 %v170
  %v743 = vunpack.c.l.b16 %v171
  %v744 = vunpack.c.l.b16 %v172
  %v745 = vunpack.c.l.b16 %v173
  %v746 = vunpack.c.l.b16 %v174
  %v747 = vunpack.c.l.b16 %v175
  %v748 = vunpack.c.l.b16 %v176
  %v749 = vunpack.c.l.b16 %v177
  %v750 = vunpack.c.l.b16 %v178
  %v751 = vunpack.c.l.b16 %v179
  %v752 = vunpack.c.l.b16 %v180
  %v753 = vunpack.c.l.b16 %v181
  %v754 = vunpack.c.l.b16 %v182
  %v755 = vunpack.c.l.b16 %v183
  %v756 = vunpack.c.l.b16 %v184
  %v757 = vunpack.c.l.b16 %v185
  %v758 = vunpack.c.l.b16 %v186
  %v759 = vunpack.c.l.b16 %v187
  %v760 = vunpack.c.l.b16 %v188
  %v761 = vunpack.c.l.b16 %v189
  %v762 = vunpack.c.l.b16 %v190
  %v763 = vunpack.c.l.b16 %v191
  %v764 = vunpack.c.l.b16 %v192
  %v765 = vunpack.c.l.b16 %v193
  %v766 = vunpack.c.l.b16 %v194
  %v767 = vunpack.c.l.b16 %v195
  %v768 = vunpack.c.l.b16 %v196
  %v769 = vunpack.c.l.b16 %v197
  %v770 = vunpack.c.l.b16 %v198
  %v771 = vunpack.c.l.b16 %v199
  %v772 = vunpack.c.l.b16 %v200
  %v773 = vunpack.c.l.b16 %v201
  %v774 = vunpack.c.l.b16 %v202
  %v775 = vunpack.c.l.b16 %v203
  %v776 = vunpack.c.l.b16 %v204
  %v777 = vunpack.c.l.b16 %v205
  %v778 = vunpack.c.l.b16 %v206
  %v779 = vunpack.c.l.b16 %v207
  %v780 = vunpack.c.l.b16 %v208
  %v781 = vunpack.c.l.b16 %v209
  %v782 = vunpack.c.l.b16 %v210
  %v783 = vunpack.c.l.b16 %v211
  %v784 = vunpack.c.l.b16 %v212
  %v785 = vunpack.c.l.b16 %v213
  %v786 = vunpack.c.l.b16 %v214
  %v787 = vunpack.c.l.b16 %v215
  %v788 = vunpack.c.l.b16 %v216
  %v789 = vunpack.c.l.b16 %v217
  %v790 = vunpack.c.l.b16 %v218
  %v791 = vunpack.c.l.b16 %v219
  %v792 = vunpack.c.l.b16 %v220
  %v793 = vunpack.c.l.b16 %v221
  %v794 = vunpack.c.l.b16 %v222
  %v795 = vunpack.c.l.b16 %v223
  %v796 = vunpack.c.l.b16 %v224
  %v797 = vunpack.c.l.b16 %v225
  %v798 = vunpack.c.l.b16 %v226
  %v799 = vunpack.c.l.b16 %v227
  %v800 = vunpack.c.l.b16 %v228
  %v801 = vunpack.c.l.b16 %v229
  %v802 = vunpack.c.l.b16 %v230
  %v803 = vunpack.c.l.b16 %v231
  %v804 = vunpack.c.l.b16 %v232
  %v805 = vunpack.c.l.b16 %v233
  %v806 = vunpack.c.l.b16 %v234
  %v807 = vunpack.c.l.b16 %v235
  %v808 = vunpack.c.l.b16 %v236
  %v809 = vunpack.c.l.b16 %v237
  %v810 = vunpack.c.l.b16 %v238
  %v811 = vunpack.c.l.b16 %v239
  %v812 = vunpack.c.l.b16 %v240
  %v813 = vunpack.c.l.b16 %v241
  %v814 = vunpack.c.l.b16 %v242
  %v815 = vunpack.c.l.b16 %v243
  %v816 = vunpack.c.l.b16 %v244
  %v817 = vunpack.c.l.b16 %v245
  %v818 = vunpack.c.l.b16 %v246
  %v819 = vunpack.c.l.b16 %v247
  %v820 = vunpack.c.l.b16 %v248
  %v821 = vunpack.c.l.b16 %v249
  %v822 = vunpack.c.l.b16 %v250
  %v823 = vunpack.c.l.b16 %v251
  %v824 = vunpack.c.l.b16 %v252
  %v825 = vunpack.c.l.b16 %v253
  %v826 = vunpack.c.l.b16 %v254
  %v827 = vunpack.c.l.b16 %v255
  %v828 = vunpack.c.l.b16 %v256
  %v829 = vunpack.c.l.b16 %v257
  %v830 = vunpack.c.l.b16 %v258
  %v831 = vunpack.c.l.b16 %v259
  %v832 = vunpack.c.l.b16 %v260
  %v833 = vunpack.c.l.b16 %v261
  %v834 = vunpack.c.l.b16 %v262
  %v835 = vunpack.c.l.b16 %v263
  %v836 = vunpack.c.l.b16 %v264
  %v837 = vunpack.c.l.b16 %v265
  %v838 = vunpack.c.l.b16 %v266
  %v839 = vunpack.c.l.b16 %v267
  %v840 = vunpack.c.l.b16 %v268
  %v841 = vunpack.c.l.b16 %v269
  %v842 = vunpack.c.l.b16 %v270
  %v843 = vunpack.c.l.b16 %v271
  %v844 = vunpack.c.l.b16 %v272
  %v845 = vunpack.c.l.b16 %v273
  %v846 = vunpack.c.l.b16 %v274
  %v847 = vunpack.c.l.b16 %v275
  %v848 = vunpack.c.l.b16 %v276
  %v849 = vunpack.c.l.b16 %v277
  %v850 = vunpack.c.l.b16 %v278
  %v851 = vunpack.c.l.b16 %v279
  %v852 = vunpack.c.l.b16 %v280
  %v853 = vunpack.c.l.b16 %v281
  %v854 = vunpack.c.l.b16 %v282
  %v855 = vunpack.c.l.b16 %v283
  %v856 = vunpack.c.l.b16 %v284
  %v857 = vunpack.c.l.b16 %v285
  %v858 = vunpack.c.l.b16 %v286
  %v859 = vunpack.c.l.b16 %v287
  %v860 = vunpack.c.l.b16 %v288
  %v861 = vunpack.c.l.b16 %v289
  %v862 = vpack.c.b16 %v607, %v606
  %v863 = vpack.c.b16 %v609, %v608
  %v864 = vpack.c.b16 %v611, %v610
  %v865 = vpack.c.b16 %v613, %v612
  %v866 = vpack.c.b16 %v615, %v614
  %v867 = vpack.c.b16 %v617, %v616
  %v868 = vpack.c.b16 %v619, %v618
  %v869 = vpack.c.b16 %v621, %v620
  %v870 = vpack.c.b16 %v623, %v622
  %v871 = vpack.c.b16 %v625, %v624
  %v872 = vpack.c.b16 %v627, %v626
  %v873 = vpack.c.b16 %v629, %v628
  %v874 = vpack.c.b16 %v631, %v630
  %v875 = vpack.c.b16 %v633, %v632
  %v876 = vpack.c.b16 %v635, %v634
  %v877 = vpack.c.b16 %v637, %v636
  %v878 = vpack.c.b16 %v639, %v638
  %v879 = vpack.c.b16 %v641, %v640
  %v880 = vpack.c.b16 %v643, %v642
  %v881 = vpack.c.b16 %v645, %v644
  %v882 = vpack.c.b16 %v647, %v646
  %v883 = vpack.c.b16 %v649, %v648
  %v884 = vpack.c.b16 %v651, %v650
  %v885 = vpack.c.b16 %v653, %v652
  %v886 = vpack.c.b16 %v655, %v654
  %v887 = vpack.c.b16 %v657, %v656
  %v888 = vpack.c.b16 %v659, %v658
  %v889 = vpack.c.b16 %v661, %v660
  %v890 = vpack.c.b16 %v663, %v662
  %v891 = vpack.c.b16 %v665, %v664
  %v892 = vpack.c.b16 %v667, %v666
  %v893 = vpack.c.b16 %v669, %v668
  %v894 = vpack.c.b16 %v671, %v670
  %v895 = vpack.c.b16 %v673, %v672
  %v896 = vpack.c.b16 %v675, %v674
  %v897 = vpack.c.b16 %v677, %v676
  %v898 = vpack.c.b16 %v679, %v678
  %v899 = vpack.c.b16 %v681, %v680
  %v900 = vpack.c.b16 %v683, %v682
  %v901 = vpack.c.b16 %v685, %v684
  %v902 = vpack.c.b16 %v687, %v686
  %v903 = vpack.c.b16 %v689, %v688
  %v904 = vpack.c.b16 %v691, %v690
  %v905 = vpack.c.b16 %v693, %v692
  %v906 = vpack.c.b16 %v695, %v694
  %v907 = vpack.c.b16 %v697, %v696
  %v908 = vpack.c.b16 %v699, %v698
  %v909 = vpack.c.b16 %v701, %v700
  %v910 = vpack.c.b16 %v703, %v702
  %v911 = vpack.c.b16 %v705, %v704
  %v912 = vpack.c.b16 %v707, %v706
  %v913 = vpack.c.b16 %v709, %v708
  %v914 = vpack.c.b16 %v711, %v710
  %v915 = vpack.c.b16 %v713, %v712
  %v916 = vpack.c.b16 %v715, %v714
  %v917 = vpack.c.b16 %v717, %v716
  %v918 = vpack.c.b16 %v719, %v718
  %v919 = vpack.c.b16 %v721, %v720
  %v920 = vpack.c.b16 %v723, %v722
  %v921 = vpack.c.b16 %v725, %v724
  %v922 = vpack.c.b16 %v727, %v726
  %v923 = vpack.c.b16 %v729, %v728
  %v924 = vpack.c.b16 %v731, %v730
  %v925 = vpack.c.b16 %v733, %v732
  %v926 = vpack.c.b16 %v735, %v734
  %v927 = vpack.c.b16 %v737, %v736
  %v928 = vpack.c.b16 %v739, %v738
  %v929 = vpack.c.b16 %v741, %v740
  %v930 = vpack.c.b16 %v743, %v742
  %v931 = vpack.c.b16 %v745, %v744
  %v932 = vpack.c.b16 %v747, %v746
  %v933 = vpack.c.b16 %v749, %v748
  %v934 = vpack.c.b16 %v751, %v750
  %v935 = vpack.c.b16 %v753, %v752
  %v936 = vpack.c.b16 %v755, %v754
  %v937 = vpack.c.b16 %v757, %v756
  %v938 = vpack.c.b16 %v759, %v758
  %v939 = vpack.c.b16 %v761, %v760
  %v940 = vpack.c.b16 %v763, %v762
  %v941 = vpack.c.b16 %v765, %v764
  %v942 = vpack.c.b16 %v767, %v766
  %v943 = vpack.c.b16 %v769, %v768
  %v944 = vpack.c.b16 %v771, %v770
  %v945 = vpack.c.b16 %v773, %v772
  %v946 = vpack.c.b16 %v775, %v774
  %v947 = vpack.c.b16 %v777, %v776
  %v948 = vpack.c.b16 %v779, %v778
  %v949 = vpack.c.b16 %v781, %v780
  %v950 = vpack.c.b16 %v783, %v782
  %v951 = vpack.c.b16 %v785, %v784
  %v952 = vpack.c.b16 %v787, %v786
  %v953 = vpack.c.b16 %v789, %v788
  %v954 = vpack.c.b16 %v791, %v790
  %v955 = vpack.c.b16 %v793, %v792
  %v956 = vpack.c.b16 %v795, %v794
  %v957 = vpack.c.b16 %v797, %v796
  %v958 = vpack.c.b16 %v799, %v798
  %v959 = vpack.c.b16 %v801, %v800
  %v960 = vpack.c.b16 %v803, %v802
  %v961 = vpack.c.b16 %v805, %v804
  %v962 = vpack.c.b16 %v807, %v806
  %v963 = vpack.c.b16 %v809, %v808
  %v964 = vpack.c.b16 %v811, %v810
  %v965 = vpack.c.b16 %v813, %v812
  %v966 = vpack.c.b16 %v815, %v814
  %v967 = vpack.c.b16 %v817, %v816
  %v968 = vpack.c.b16 %v819, %v818
  %v969 = vpack.c.b16 %v821, %v820
  %v970 = vpack.c.b16 %v823, %v822
  %v971 = vpack.c.b16 %v825, %v824
  %v972 = vpack.c.b16 %v827, %v826
  %v973 = vpack.c.b16 %v829, %v828
  %v974 = vpack.c.b16 %v831, %v830
  %v975 = vpack.c.b16 %v833, %v832
  %v976 = vpack.c.b16 %v835, %v834
  %v977 = vpack.c.b16 %v837, %v836
  %v978 = vpack.c.b16 %v839, %v838
  %v979 = vpack.c.b16 %v841, %v840
  %v980 = vpack.c.b16 %v843, %v842
  %v981 = vpack.c.b16 %v845, %v844
  %v982 = vpack.c.b16 %v847, %v846
  %v983 = vpack.c.b16 %v849, %v848
  %v984 = vpack.c.b16 %v851, %v850
  %v985 = vpack.c.b16 %v853, %v852
  %v986 = vpack.c.b16 %v855, %v854
  %v987 = vpack.c.b16 %v857, %v856
  %v988 = vpack.c.b16 %v859, %v858
  %v989 = vpack.c.b16 %v861, %v860
  %1118 = vmatpush.bf16.msra.mxu0 %v869
  %1119 = vmatpush.bf16.msra.mxu0 %v868
  %1120 = vmatpush.bf16.msra.mxu0 %v867
  %1121 = vmatpush.bf16.msra.mxu0 %v866
  %1122 = vmatpush.bf16.msra.mxu0 %v865
  %1123 = vmatpush.bf16.msra.mxu0 %v864
  %1124 = vmatpush.bf16.msra.mxu0 %v863
  %1125 = vmatpush.bf16.msra.mxu0 %v862
  %1126 = vmatmul.bf16.gmra.mxu0 %v318
  %v1127 = vpop.f32.mrf.mxu0
  %v1128 = vadd.f32 %v292, %v1127
  %v1129 = vpop.f32.mrf.mxu0
  %1130 = vdwg.mxu0
  %1131 = vmatpush.bf16.msra.mxu0 %v877
  %1132 = vmatpush.bf16.msra.mxu0 %v876
  %1133 = vmatpush.bf16.msra.mxu0 %v875
  %1134 = vmatpush.bf16.msra.mxu0 %v874
  %1135 = vmatpush.bf16.msra.mxu0 %v873
  %1136 = vmatpush.bf16.msra.mxu0 %v872
  %1137 = vmatpush.bf16.msra.mxu0 %v871
  %1138 = vmatpush.bf16.msra.mxu0 %v870
  %1139 = vmatmul.bf16.gmra.mxu0 %v319
  %v1140 = vpop.f32.mrf.mxu0
  %v1141 = vadd.f32 %v1128, %v1140
  %v1142 = vpop.f32.mrf.mxu0
  %1143 = vdwg.mxu0
  %1144 = vmatpush.bf16.msra.mxu0 %v885
  %1145 = vmatpush.bf16.msra.mxu0 %v884
  %1146 = vmatpush.bf16.msra.mxu0 %v883
  %1147 = vmatpush.bf16.msra.mxu0 %v882
  %1148 = vmatpush.bf16.msra.mxu0 %v881
  %1149 = vmatpush.bf16.msra.mxu0 %v880
  %1150 = vmatpush.bf16.msra.mxu0 %v879
  %1151 = vmatpush.bf16.msra.mxu0 %v878
  %1152 = vmatmul.bf16.gmra.mxu0 %v320
  %v1153 = vpop.f32.mrf.mxu0
  %v1154 = vadd.f32 %v1141, %v1153
  %v1155 = vpop.f32.mrf.mxu0
  %1156 = vdwg.mxu0
  %1157 = vmatpush.bf16.msra.mxu0 %v893
  %1158 = vmatpush.bf16.msra.mxu0 %v892
  %1159 = vmatpush.bf16.msra.mxu0 %v891
  %1160 = vmatpush.bf16.msra.mxu0 %v890
  %1161 = vmatpush.bf16.msra.mxu0 %v889
  %1162 = vmatpush.bf16.msra.mxu0 %v888
  %1163 = vmatpush.bf16.msra.mxu0 %v887
  %1164 = vmatpush.bf16.msra.mxu0 %v886
  %1165 = vmatmul.bf16.gmra.mxu0 %v321
  %v1166 = vpop.f32.mrf.mxu0
  %v1167 = vadd.f32 %v1154, %v1166
  %v1168 = vpop.f32.mrf.mxu0
  %1169 = vdwg.mxu0
  %1170 = vmatpush.bf16.msra.mxu0 %v901
  %1171 = vmatpush.bf16.msra.mxu0 %v900
  %1172 = vmatpush.bf16.msra.mxu0 %v899
  %1173 = vmatpush.bf16.msra.mxu0 %v898
  %1174 = vmatpush.bf16.msra.mxu0 %v897
  %1175 = vmatpush.bf16.msra.mxu0 %v896
  %1176 = vmatpush.bf16.msra.mxu0 %v895
  %1177 = vmatpush.bf16.msra.mxu0 %v894
  %1178 = vmatmul.bf16.gmra.mxu0 %v322
  %v1179 = vpop.f32.mrf.mxu0
  %v1180 = vadd.f32 %v1167, %v1179
  %v1181 = vpop.f32.mrf.mxu0
  %1182 = vdwg.mxu0
  %1183 = vmatpush.bf16.msra.mxu0 %v909
  %1184 = vmatpush.bf16.msra.mxu0 %v908
  %1185 = vmatpush.bf16.msra.mxu0 %v907
  %1186 = vmatpush.bf16.msra.mxu0 %v906
  %1187 = vmatpush.bf16.msra.mxu0 %v905
  %1188 = vmatpush.bf16.msra.mxu0 %v904
  %1189 = vmatpush.bf16.msra.mxu0 %v903
  %1190 = vmatpush.bf16.msra.mxu0 %v902
  %1191 = vmatmul.bf16.gmra.mxu0 %v323
  %v1192 = vpop.f32.mrf.mxu0
  %v1193 = vadd.f32 %v1180, %v1192
  %v1194 = vpop.f32.mrf.mxu0
  %1195 = vdwg.mxu0
  %1196 = vmatpush.bf16.msra.mxu0 %v917
  %1197 = vmatpush.bf16.msra.mxu0 %v916
  %1198 = vmatpush.bf16.msra.mxu0 %v915
  %1199 = vmatpush.bf16.msra.mxu0 %v914
  %1200 = vmatpush.bf16.msra.mxu0 %v913
  %1201 = vmatpush.bf16.msra.mxu0 %v912
  %1202 = vmatpush.bf16.msra.mxu0 %v911
  %1203 = vmatpush.bf16.msra.mxu0 %v910
  %1204 = vmatmul.bf16.gmra.mxu0 %v324
  %v1205 = vpop.f32.mrf.mxu0
  %v1206 = vadd.f32 %v1193, %v1205
  %v1207 = vpop.f32.mrf.mxu0
  %1208 = vdwg.mxu0
  %1209 = vmatpush.bf16.msra.mxu0 %v925
  %1210 = vmatpush.bf16.msra.mxu0 %v924
  %1211 = vmatpush.bf16.msra.mxu0 %v923
  %1212 = vmatpush.bf16.msra.mxu0 %v922
  %1213 = vmatpush.bf16.msra.mxu0 %v921
  %1214 = vmatpush.bf16.msra.mxu0 %v920
  %1215 = vmatpush.bf16.msra.mxu0 %v919
  %1216 = vmatpush.bf16.msra.mxu0 %v918
  %1217 = vmatmul.bf16.gmra.mxu0 %v325
  %v1218 = vpop.f32.mrf.mxu0
  %v1219 = vadd.f32 %v1206, %v1218
  %v1220 = vpop.f32.mrf.mxu0
  %1221 = vdwg.mxu0
  %1222 = vmatpush.bf16.msra.mxu0 %v933
  %1223 = vmatpush.bf16.msra.mxu0 %v932
  %1224 = vmatpush.bf16.msra.mxu0 %v931
  %1225 = vmatpush.bf16.msra.mxu0 %v930
  %1226 = vmatpush.bf16.msra.mxu0 %v929
  %1227 = vmatpush.bf16.msra.mxu0 %v928
  %1228 = vmatpush.bf16.msra.mxu0 %v927
  %1229 = vmatpush.bf16.msra.mxu0 %v926
  %1230 = vmatmul.bf16.gmra.mxu0 %v326
  %v1231 = vpop.f32.mrf.mxu0
  %v1232 = vadd.f32 %v1219, %v1231
  %v1233 = vpop.f32.mrf.mxu0
  %1234 = vdwg.mxu0
  %1235 = vmatpush.bf16.msra.mxu0 %v941
  %1236 = vmatpush.bf16.msra.mxu0 %v940
  %1237 = vmatpush.bf16.msra.mxu0 %v939
  %1238 = vmatpush.bf16.msra.mxu0 %v938
  %1239 = vmatpush.bf16.msra.mxu0 %v937
  %1240 = vmatpush.bf16.msra.mxu0 %v936
  %1241 = vmatpush.bf16.msra.mxu0 %v935
  %1242 = vmatpush.bf16.msra.mxu0 %v934
  %1243 = vmatmul.bf16.gmra.mxu0 %v327
  %v1244 = vpop.f32.mrf.mxu0
  %v1245 = vadd.f32 %v1232, %v1244
  %v1246 = vpop.f32.mrf.mxu0
  %1247 = vdwg.mxu0
  %1248 = vmatpush.bf16.msra.mxu0 %v949
  %1249 = vmatpush.bf16.msra.mxu0 %v948
  %1250 = vmatpush.bf16.msra.mxu0 %v947
  %1251 = vmatpush.bf16.msra.mxu0 %v946
  %1252 = vmatpush.bf16.msra.mxu0 %v945
  %1253 = vmatpush.bf16.msra.mxu0 %v944
  %1254 = vmatpush.bf16.msra.mxu0 %v943
  %1255 = vmatpush.bf16.msra.mxu0 %v942
  %1256 = vmatmul.bf16.gmra.mxu0 %v328
  %v1257 = vpop.f32.mrf.mxu0
  %v1258 = vadd.f32 %v1245, %v1257
  %v1259 = vpop.f32.mrf.mxu0
  %1260 = vdwg.mxu0
  %1261 = vmatpush.bf16.msra.mxu0 %v957
  %1262 = vmatpush.bf16.msra.mxu0 %v956
  %1263 = vmatpush.bf16.msra.mxu0 %v955
  %1264 = vmatpush.bf16.msra.mxu0 %v954
  %1265 = vmatpush.bf16.msra.mxu0 %v953
  %1266 = vmatpush.bf16.msra.mxu0 %v952
  %1267 = vmatpush.bf16.msra.mxu0 %v951
  %1268 = vmatpush.bf16.msra.mxu0 %v950
  %1269 = vmatmul.bf16.gmra.mxu0 %v329
  %v1270 = vpop.f32.mrf.mxu0
  %v1271 = vadd.f32 %v1258, %v1270
  %v1272 = vpop.f32.mrf.mxu0
  %1273 = vdwg.mxu0
  %1274 = vmatpush.bf16.msra.mxu0 %v965
  %1275 = vmatpush.bf16.msra.mxu0 %v964
  %1276 = vmatpush.bf16.msra.mxu0 %v963
  %1277 = vmatpush.bf16.msra.mxu0 %v962
  %1278 = vmatpush.bf16.msra.mxu0 %v961
  %1279 = vmatpush.bf16.msra.mxu0 %v960
  %1280 = vmatpush.bf16.msra.mxu0 %v959
  %1281 = vmatpush.bf16.msra.mxu0 %v958
  %1282 = vmatmul.bf16.gmra.mxu0 %v330
  %v1283 = vpop.f32.mrf.mxu0
  %v1284 = vadd.f32 %v1271, %v1283
  %v1285 = vpop.f32.mrf.mxu0
  %1286 = vdwg.mxu0
  %1287 = vmatpush.bf16.msra.mxu0 %v973
  %1288 = vmatpush.bf16.msra.mxu0 %v972
  %1289 = vmatpush.bf16.msra.mxu0 %v971
  %1290 = vmatpush.bf16.msra.mxu0 %v970
  %1291 = vmatpush.bf16.msra.mxu0 %v969
  %1292 = vmatpush.bf16.msra.mxu0 %v968
  %1293 = vmatpush.bf16.msra.mxu0 %v967
  %1294 = vmatpush.bf16.msra.mxu0 %v966
  %1295 = vmatmul.bf16.gmra.mxu0 %v331
  %v1296 = vpop.f32.mrf.mxu0
  %v1297 = vadd.f32 %v1284, %v1296
  %v1298 = vpop.f32.mrf.mxu0
  %1299 = vdwg.mxu0
  %1300 = vmatpush.bf16.msra.mxu0 %v981
  %1301 = vmatpush.bf16.msra.mxu0 %v980
  %1302 = vmatpush.bf16.msra.mxu0 %v979
  %1303 = vmatpush.bf16.msra.mxu0 %v978
  %1304 = vmatpush.bf16.msra.mxu0 %v977
  %1305 = vmatpush.bf16.msra.mxu0 %v976
  %1306 = vmatpush.bf16.msra.mxu0 %v975
  %1307 = vmatpush.bf16.msra.mxu0 %v974
  %1308 = vmatmul.bf16.gmra.mxu0 %v332
  %v1309 = vpop.f32.mrf.mxu0
  %v1310 = vadd.f32 %v1297, %v1309
  %v1311 = vpop.f32.mrf.mxu0
  %1312 = vdwg.mxu0
  %1313 = vmatpush.bf16.msra.mxu0 %v989
  %1314 = vmatpush.bf16.msra.mxu0 %v988
  %1315 = vmatpush.bf16.msra.mxu0 %v987
  %1316 = vmatpush.bf16.msra.mxu0 %v986
  %1317 = vmatpush.bf16.msra.mxu0 %v985
  %1318 = vmatpush.bf16.msra.mxu0 %v984
  %1319 = vmatpush.bf16.msra.mxu0 %v983
  %1320 = vmatpush.bf16.msra.mxu0 %v982
  %1321 = vmatmul.bf16.gmra.mxu0 %v333
  %v1322 = vpop.f32.mrf.mxu0
  %v1323 = vadd.f32 %v1310, %v1322
  %v1324 = vpop.f32.mrf.mxu0
  %1325 = vdwg.mxu0
  %v1326 = vmax.f32 %v1323, 0.0
  %v1327 = vpack.c.bf16 %v1326, %v1326
  %v1328 = vld [vmem:[%s3] sm:$0xf]
  %v1329 = vld [vmem:[%s3 + $0x4] sm:$0xf]
  %v1330 = vld [vmem:[%s3 + $0x8] sm:$0xf]
  %v1331 = vld [vmem:[%s3 + $0xc] sm:$0xf]
  %v1332 = vld [vmem:[%s3 + $0x10] sm:$0xf]
  %v1333 = vld [vmem:[%s3 + $0x14] sm:$0xf]
  %v1334 = vld [vmem:[%s3 + $0x18] sm:$0xf]
  %v1335 = vld [vmem:[%s3 + $0x1c] sm:$0xf]
  %v1336 = vld [vmem:[%s3 + $0x20] sm:$0xf]
  %v1337 = vld [vmem:[%s3 + $0x24] sm:$0xf]
  %v1338 = vld [vmem:[%s3 + $0x28] sm:$0xf]
  %v1339 = vld [vmem:[%s3 + $0x2c] sm:$0xf]
  %v1340 = vld [vmem:[%s3 + $0x30] sm:$0xf]
  %v1341 = vld [vmem:[%s3 + $0x34] sm:$0xf]
  %v1342 = vld [vmem:[%s3 + $0x38] sm:$0xf]
  %v1343 = vld [vmem:[%s3 + $0x3c] sm:$0xf]
  %v1344 = vld [vmem:[%s4] sm:$0x1]
  %v1346 = vperm.slane %v1344, 0
  %v1364 = vunpack.c.l.b16 %v1328
  %v1365 = vunpack.c.l.b16 %v1329
  %v1366 = vunpack.c.l.b16 %v1330
  %v1367 = vunpack.c.l.b16 %v1331
  %v1368 = vunpack.c.l.b16 %v1332
  %v1369 = vunpack.c.l.b16 %v1333
  %v1370 = vunpack.c.l.b16 %v1334
  %v1371 = vunpack.c.l.b16 %v1335
  %v1372 = vunpack.c.l.b16 %v1336
  %v1373 = vunpack.c.l.b16 %v1337
  %v1374 = vunpack.c.l.b16 %v1338
  %v1375 = vunpack.c.l.b16 %v1339
  %v1376 = vunpack.c.l.b16 %v1340
  %v1377 = vunpack.c.l.b16 %v1341
  %v1378 = vunpack.c.l.b16 %v1342
  %v1379 = vunpack.c.l.b16 %v1343
  %v1380 = vpack.c.b16 %v1365, %v1364
  %v1381 = vpack.c.b16 %v1367, %v1366
  %v1382 = vpack.c.b16 %v1369, %v1368
  %v1383 = vpack.c.b16 %v1371, %v1370
  %v1384 = vpack.c.b16 %v1373, %v1372
  %v1385 = vpack.c.b16 %v1375, %v1374
  %v1386 = vpack.c.b16 %v1377, %v1376
  %v1387 = vpack.c.b16 %v1379, %v1378
  %1396 = vmatpush.bf16.msra.mxu0 %v1387
  %1397 = vmatpush.bf16.msra.mxu0 %v1386
  %1398 = vmatpush.bf16.msra.mxu0 %v1385
  %1399 = vmatpush.bf16.msra.mxu0 %v1384
  %1400 = vmatpush.bf16.msra.mxu0 %v1383
  %1401 = vmatpush.bf16.msra.mxu0 %v1382
  %1402 = vmatpush.bf16.msra.mxu0 %v1381
  %1403 = vmatpush.bf16.msra.mxu0 %v1380
  %1404 = vmatmul.bf16.gmra.mxu0 %v1327
  %v1405 = vpop.f32.mrf.mxu0
  %v1406 = vadd.f32 %v1346, %v1405
  %v1407 = vpop.f32.mrf.mxu0
  %1408 = vdwg.mxu0
  %v1409 = vmax.f32 %v1406, 0.0
  %v1410 = vpack.c.bf16 %v1409, %v1409
  %v1411 = vld [vmem:[%s5] sm:$0xf]
  %v1412 = vld [vmem:[%s5 + $0x4] sm:$0xf]
  %v1413 = vld [vmem:[%s5 + $0x8] sm:$0xf]
  %v1414 = vld [vmem:[%s5 + $0xc] sm:$0xf]
  %v1415 = vld [vmem:[%s5 + $0x10] sm:$0xf]
  %v1416 = vld [vmem:[%s5 + $0x14] sm:$0xf]
  %v1417 = vld [vmem:[%s5 + $0x18] sm:$0xf]
  %v1418 = vld [vmem:[%s5 + $0x1c] sm:$0xf]
  %v1419 = vld [vmem:[%s5 + $0x20] sm:$0xf]
  %v1420 = vld [vmem:[%s5 + $0x24] sm:$0xf]
  %v1421 = vld [vmem:[%s5 + $0x28] sm:$0xf]
  %v1422 = vld [vmem:[%s5 + $0x2c] sm:$0xf]
  %v1423 = vld [vmem:[%s5 + $0x30] sm:$0xf]
  %v1424 = vld [vmem:[%s5 + $0x34] sm:$0xf]
  %v1425 = vld [vmem:[%s5 + $0x38] sm:$0xf]
  %v1426 = vld [vmem:[%s5 + $0x3c] sm:$0xf]
  %v1427 = vld [vmem:[%s6] sm:$0x1]
  %v1429 = vperm.slane %v1427, 0
  %v1447 = vunpack.c.l.b16 %v1411
  %v1448 = vunpack.c.l.b16 %v1412
  %v1449 = vunpack.c.l.b16 %v1413
  %v1450 = vunpack.c.l.b16 %v1414
  %v1451 = vunpack.c.l.b16 %v1415
  %v1452 = vunpack.c.l.b16 %v1416
  %v1453 = vunpack.c.l.b16 %v1417
  %v1454 = vunpack.c.l.b16 %v1418
  %v1455 = vunpack.c.l.b16 %v1419
  %v1456 = vunpack.c.l.b16 %v1420
  %v1457 = vunpack.c.l.b16 %v1421
  %v1458 = vunpack.c.l.b16 %v1422
  %v1459 = vunpack.c.l.b16 %v1423
  %v1460 = vunpack.c.l.b16 %v1424
  %v1461 = vunpack.c.l.b16 %v1425
  %v1462 = vunpack.c.l.b16 %v1426
  %v1463 = vpack.c.b16 %v1448, %v1447
  %v1464 = vpack.c.b16 %v1450, %v1449
  %v1465 = vpack.c.b16 %v1452, %v1451
  %v1466 = vpack.c.b16 %v1454, %v1453
  %v1467 = vpack.c.b16 %v1456, %v1455
  %v1468 = vpack.c.b16 %v1458, %v1457
  %v1469 = vpack.c.b16 %v1460, %v1459
  %v1470 = vpack.c.b16 %v1462, %v1461
  %1479 = vmatpush.bf16.msra.mxu0 %v1470
  %1480 = vmatpush.bf16.msra.mxu0 %v1469
  %1481 = vmatpush.bf16.msra.mxu0 %v1468
  %1482 = vmatpush.bf16.msra.mxu0 %v1467
  %1483 = vmatpush.bf16.msra.mxu0 %v1466
  %1484 = vmatpush.bf16.msra.mxu0 %v1465
  %1485 = vmatpush.bf16.msra.mxu0 %v1464
  %1486 = vmatpush.bf16.msra.mxu0 %v1463
  %1487 = vmatmul.bf16.gmra.mxu0 %v1410
  %v1488 = vpop.f32.mrf.mxu0
  %v1489 = vadd.f32 %v1429, %v1488
  %v1490 = vpop.f32.mrf.mxu0
  %1491 = vdwg.mxu0
  %1492 = vst [vmem:[%s7] sm:$0xff] %v1489
  // Predicated region
  $region30: #{panns_forward.1} parent=0 // pred_check
    _
  $region31: #{panns_forward.1} parent=0 // pred_check_branch
    %1494 = sbr.rel (0) target = $region33
  $region32: #{panns_forward.1} parent=0 // pred_region
    _
  $region33: #{panns_forward.1} parent=0 // pred_fallthru
    _
  // Predicated region
  $region34: #{panns_forward.1} parent=0 // pred_check
    _
  $region35: #{panns_forward.1} parent=0 // pred_check_branch
    %1496 = sbr.rel (0) target = $region37
  $region36: #{panns_forward.1} parent=0 // pred_region
    _
  $region37: #{panns_forward.1} parent=0 // pred_fallthru
    _

</llo_original>
